<compile_context>
chip_gen: v5e
topology: v5e:2x2
jax: 0.10.0
libtpu: 0.0.40
codegen_flags: <defaults>
</compile_context>

<pallas_src>
import functools

import jax
import jax.numpy as jnp
from jax.experimental import pallas as pl
from jax.experimental.pallas import tpu as pltpu

# Stand-ins for the module's `config.BUFFER_SIZE` / `config.HOP_LENGTH`.
# Chosen so every slice boundary is a multiple of 128 lanes (TPU-friendly),
# while keeping the hard-coded 2048 prefix from the original module.
BUFFER_SIZE = 512
HOP_LENGTH = 128

_LANE = 128  # TPU lane width; keep slice boundaries aligned to this.


def _buffer_stft_kernel(buf_ref, x_ref, out_ref):
    """Shift the ring buffer left by B samples and append x at the end.

    All refs are full arrays resident in VMEM (no grid).  Input and output
    are separate VMEM tiles even though their HBM backing is aliased, so the
    overlapping read is safe.
    """
    L = out_ref.shape[-1]
    B = x_ref.shape[-1]
    # roll(-B) followed by overwriting the last B samples == left shift by B:
    out_ref[:, : L - B] = buf_ref[:, B:]
    out_ref[:, L - B:] = x_ref[...]


@functools.partial(jax.jit, donate_argnums=(0,))
def buffer_stft_forward(buffer, x):
    """Functional forward: returns the updated buffer (shape (1, L)).

    `buffer` is donated: its HBM storage is reused for the output via
    input_output_aliases, so the per-hop cost is the VMEM shift only.
    """
    C, L = buffer.shape
    B = x.shape[-1]
    # Streaming contract / lane-alignment guards (see performance review).
    assert B <= L, f"chunk ({B}) must fit in buffer ({L})"
    assert B == BUFFER_SIZE, f"expected chunk of {BUFFER_SIZE}, got {B}"
    assert B % _LANE == 0 and L % _LANE == 0, (
        "shift boundary must be 128-lane aligned to avoid XLU lane rotates"
    )

    return pl.pallas_call(
        _buffer_stft_kernel,
        out_shape=jax.ShapeDtypeStruct((C, L), buffer.dtype),
        # No grid: single invocation, whole arrays in VMEM (total ~20 KB).
        in_specs=[
            pl.BlockSpec(memory_space=pltpu.MemorySpace.VMEM),  # old buffer
            pl.BlockSpec(memory_space=pltpu.MemorySpace.VMEM),  # new chunk x
        ],
        out_specs=pl.BlockSpec(memory_space=pltpu.MemorySpace.VMEM),
        # Alias the donated old buffer with the output: no fresh HBM
        # allocation / copy per hop.
        input_output_aliases={0: 0},
    )(buffer, x)


def _reference(buffer, x):
    B = x.shape[-1]
    return jnp.concatenate([buffer[:, B:], x], axis=-1)


if __name__ == "__main__":
    n_frame = BUFFER_SIZE // HOP_LENGTH - 1          # as in the module's __init__
    L = 2048 + n_frame * HOP_LENGTH                  # total buffer length (2432)

    key = jax.random.PRNGKey(0)
    k1, k2 = jax.random.split(key)
    x1 = jax.random.normal(k1, (1, BUFFER_SIZE), jnp.float32)
    x2 = jax.random.normal(k2, (1, BUFFER_SIZE), jnp.float32)

    # References computed from an independent zero buffer (the module
    # initializes its buffer to zeros), so donated arrays are never re-read.
    ref0 = jnp.zeros((1, L), jnp.float32)
    ref1 = _reference(ref0, x1)
    ref2 = _reference(ref1, x2)

    # Streaming: state threaded through; each input buffer is donated.
    buffer0 = jnp.zeros((1, L), jnp.float32)
    buf1 = buffer_stft_forward(buffer0, x1)          # buffer0 donated here
    jax.block_until_ready(buf1)
    assert buf1.shape == (1, L) and buf1.dtype == jnp.float32
    assert jnp.allclose(buf1, ref1)                  # checked before buf1 is donated

    buf2 = buffer_stft_forward(buf1, x2)             # buf1 donated here
    jax.block_until_ready(buf2)
    assert buf2.shape == (1, L) and buf2.dtype == jnp.float32
    assert jnp.allclose(buf2, ref2)

    print("KERNEL_OK")
</pallas_src>

<mosaic_0001>
module attributes {stable_mosaic.version = 11 : i64} {
  func.func @_buffer_stft_kernel(%arg0: memref<1x2432xf32, #tpu.memory_space<vmem>>, %arg1: memref<1x512xf32, #tpu.memory_space<vmem>>, %arg2: memref<1x2432xf32, #tpu.memory_space<vmem>>) attributes {dimension_semantics = [], scalar_prefetch = 0 : i64, scratch_operands = 0 : i64, tpu.core_type = #tpu.core_type<tc>} {
    %c0 = arith.constant 0 : index
    %c512 = arith.constant 512 : index
    %0 = vector.load %arg0[%c0, %c512] : memref<1x2432xf32, #tpu.memory_space<vmem>>, vector<1x1920xf32>
    %c0_0 = arith.constant 0 : index
    %c0_1 = arith.constant 0 : index
    %1 = vector.load %arg2[%c0_0, %c0_1] : memref<1x2432xf32, #tpu.memory_space<vmem>>, vector<1x1920xf32>
    tpu.vector_store %arg2[%c0_0, %c0_1], %0 {strides = array<i32>} : memref<1x2432xf32, #tpu.memory_space<vmem>>, vector<1x1920xf32>,
    %c0_2 = arith.constant 0 : index
    %c0_3 = arith.constant 0 : index
    %2 = vector.load %arg1[%c0_2, %c0_3] : memref<1x512xf32, #tpu.memory_space<vmem>>, vector<1x512xf32>
    %c0_4 = arith.constant 0 : index
    %c1920 = arith.constant 1920 : index
    %3 = vector.load %arg2[%c0_4, %c1920] : memref<1x2432xf32, #tpu.memory_space<vmem>>, vector<1x512xf32>
    tpu.vector_store %arg2[%c0_4, %c1920], %2 {strides = array<i32>} : memref<1x2432xf32, #tpu.memory_space<vmem>>, vector<1x512xf32>,
    return
  }
}

</mosaic_0001>

<llo_original>
// kernel: buffer_stft_forward.1
$region0: #{buffer_stft_forward.1}
  #allocation0 [shape = 'u32[]', space=smem, size = 0x4, offset = 0x4, fixed_abs, tag = 'smem constant byte address 0x4 - core index']
  #allocation1 [shape = 'u32[72,128]{1,0:T(1,128)}', space=vmem, size = 0x9000, scoped, tag = 'internal scratch']
  %s0 = inlined_call_operand.hbm [shape: f32[1,2432], index: 0, kind: input, shape index: {}, may-alias: {0,2}]
  %s1 = inlined_call_operand.hbm [shape: f32[1,512], index: 1, kind: input, shape index: {}]
  %s2 = inlined_call_operand.hbm [shape: f32[1,2432], index: 2, kind: output, shape index: {}, may-alias: {0,2}]
  %s3 = sld [smem:[#allocation0]]
  $region26: #{buffer_stft_forward.1} parent=0
    _
  %s5 = ssub.s32 1, %s3
  %s6 = scalar_select 0, %s5, %s3
  $region1: #{buffer_stft_forward.1} parent=0
    #allocation2 [shape = 'u8[9728]{0}', space=vmem, size = 0x2800, scoped, tag = 'input window, operand 0, single buffered']
    #allocation3 [shape = 's32[1]{0}', space=sflag, size = 0x4, scoped, tag = 'scoped memory for buffer_stft_forward.1']
    #allocation4 [shape = 's32[1]{0}', space=sflag, size = 0x4, scoped, tag = 'scoped memory for buffer_stft_forward.1']
    #allocation5 [shape = 'u8[2048]{0}', space=vmem, size = 0x800, scoped, tag = 'input window, operand 1, single buffered']
    #allocation6 [shape = 's32[1]{0}', space=sflag, size = 0x4, scoped, tag = 'scoped memory for buffer_stft_forward.1']
    #allocation7 [shape = 'u8[9728]{0}', space=vmem, size = 0x2800, scoped, tag = 'output window, operand 0, single buffered']
    %7 = vsyncpa [#allocation3], 0
    %8 = vsyncpa [#allocation6], 0
    %9 = vsyncpa [#allocation4], 0
    // Predicated region
    $region2: #{buffer_stft_forward.1} parent=1 // pred_check
      _
    $region3: #{buffer_stft_forward.1} parent=1 // pred_check_branch
      %11 = sbr.rel (0) target = $region5
    $region4: #{buffer_stft_forward.1} parent=1 // pred_region
      %13 = vsyncadd [#allocation3], 0
      %s15 = sshll.u32 %s0, 4
      %s16 = int_to_ptr.hbm [resolvable:$true] %s15
      %s17 = sshll.u32 [#allocation2], 4
      %s18 = int_to_ptr.vmem [resolvable:$true] %s17
      %20 = dma.hbm_to_vmem [thread:$0]  %s16, 304, %s18, [#allocation3]
    $region5: #{buffer_stft_forward.1} parent=1 // pred_fallthru
      _
    // Predicated region
    $region6: #{buffer_stft_forward.1} parent=1 // pred_check
      _
    $region7: #{buffer_stft_forward.1} parent=1 // pred_check_branch
      %22 = sbr.rel (0) target = $region9
    $region8: #{buffer_stft_forward.1} parent=1 // pred_region
      %24 = vsyncadd [#allocation6], 0
      %s26 = sshll.u32 %s1, 4
      %s27 = int_to_ptr.hbm [resolvable:$true] %s26
      %s28 = sshll.u32 [#allocation5], 4
      %s29 = int_to_ptr.vmem [resolvable:$true] %s28
      %31 = dma.hbm_to_vmem [thread:$0]  %s27, 64, %s29, [#allocation6]
    $region9: #{buffer_stft_forward.1} parent=1 // pred_fallthru
      _
    // Predicated region
    $region10: #{buffer_stft_forward.1} parent=1 // pred_check
      _
    $region11: #{buffer_stft_forward.1} parent=1 // pred_check_branch
      %33 = sbr.rel (0) target = $region13
    $region12: #{buffer_stft_forward.1} parent=1 // pred_region
      %35 = dma.done [#allocation3], 304
    $region13: #{buffer_stft_forward.1} parent=1 // pred_fallthru
      _
    // Predicated region
    $region14: #{buffer_stft_forward.1} parent=1 // pred_check
      _
    $region15: #{buffer_stft_forward.1} parent=1 // pred_check_branch
      %37 = sbr.rel (0) target = $region17
    $region16: #{buffer_stft_forward.1} parent=1 // pred_region
      %39 = dma.done [#allocation6], 64
    $region17: #{buffer_stft_forward.1} parent=1 // pred_fallthru
      _
    %v40 = vld [vmem:[#allocation2 + $0x4] sm:$0xff]
    %v41 = vld [vmem:[#allocation2 + $0xc] sm:$0xff]
    %42 = vst [vmem:[#allocation7] sm:$0xff] %v40
    %v43 = vlaneseq
    %vm44 = vcmp.ge.s32.totalorder %v43, 0
    %vm45 = vcmp.lt.s32.totalorder %v43, 896
    %vm46 = vmand %vm44, %vm45
    %47 = vst.msk [vmem:[#allocation7 + $0x8] sm:$0x7f] %vm46, %v41
    %v48 = vld [vmem:[#allocation5] sm:$0xf]
    %vm49 = vcmp.lt.s32.totalorder %v43, 512
    %vm50 = vmand %vm44, %vm49
    %51 = vst.msk [vmem:[#allocation7 + $0xf] sm:$0xf] %vm50, %v48
    // Predicated region
    $region18: #{buffer_stft_forward.1} parent=1 // pred_check
      _
    $region19: #{buffer_stft_forward.1} parent=1 // pred_check_branch
      %53 = sbr.rel (0) target = $region21
    $region20: #{buffer_stft_forward.1} parent=1 // pred_region
      %55 = vsyncadd [#allocation4], 0
      %s57 = sshll.u32 [#allocation7], 4
      %s58 = int_to_ptr.vmem [resolvable:$true] %s57
      %s59 = sshll.u32 %s2, 4
      %s60 = int_to_ptr.hbm [resolvable:$true] %s59
      %62 = dma.vmem_to_hbm [thread:$0]  %s58, 304, %s60, [#allocation4]
    $region21: #{buffer_stft_forward.1} parent=1 // pred_fallthru
      _
    // Predicated region
    $region22: #{buffer_stft_forward.1} parent=1 // pred_check
      _
    $region23: #{buffer_stft_forward.1} parent=1 // pred_check_branch
      %64 = sbr.rel (0) target = $region25
    $region24: #{buffer_stft_forward.1} parent=1 // pred_region
      %66 = dma.done [#allocation4], 304
    $region25: #{buffer_stft_forward.1} parent=1 // pred_fallthru
      _
    %67 = vsyncpa [#allocation3], 1
    %68 = vsyncpa [#allocation6], 1
    %69 = vsyncpa [#allocation4], 1

</llo_original>
